<compile_context>
chip_gen: v7x
topology: tpu7x:2x2x1
jax: 0.10.0
libtpu: 0.0.40
codegen_flags: <defaults>
</compile_context>

<pallas_src>
import functools
import math

import jax
import jax.numpy as jnp
import numpy as np
from jax import lax
from jax.experimental import pallas as pl
from jax.experimental.pallas import tpu as pltpu


def _round_up(a: int, m: int) -> int:
    return (a + m - 1) // m * m


# ---------------------------------------------------------------------------
# 1) attention3d: global avg-pool -> fc1 -> relu -> fc2 -> softmax over K
# ---------------------------------------------------------------------------
def _attention_kernel(x_ref, w1_ref, b1_ref, w2_ref, b2_ref, out_ref, acc_ref,
                      *, inv_s, tb, c):
    s = pl.program_id(1)

    @pl.when(s == 0)
    def _init():
        acc_ref[...] = jnp.zeros_like(acc_ref)

    # One lane-axis reduce per chunk; running sum accumulated in f32.
    acc_ref[...] += jnp.sum(x_ref[...].astype(jnp.float32), axis=-1,
                            keepdims=True)

    @pl.when(s == pl.num_programs(1) - 1)
    def _finalize():
        pooled = (acc_ref[...] * inv_s).reshape(tb, c)   # fold 1/S mean scale
        h = jnp.dot(pooled, w1_ref[...],
                    preferred_element_type=jnp.float32) + b1_ref[...]
        h = jnp.maximum(h, 0.0)
        logits = jnp.dot(h, w2_ref[...],
                         preferred_element_type=jnp.float32) + b2_ref[...]
        m = jnp.max(logits, axis=-1, keepdims=True)
        e = jnp.exp(logits - m)
        denom = jnp.sum(e, axis=-1, keepdims=True)
        # Exact reciprocal: attention rows must sum to 1 (feeds every weight).
        out_ref[...] = e * pl.reciprocal(denom)


def attention3d_forward(x, w1, b1, w2, b2):
    """x: (B, C, D, H, W); w1: (C, K); b1: (K,); w2: (K, K); b2: (K,)."""
    B, C = x.shape[0], x.shape[1]
    S = int(np.prod(x.shape[2:]))
    K = w1.shape[1]

    # Flatten (B, C) onto the sublane axis -> full 8-sublane occupancy even
    # for small C; x streams in its native dtype (no f32 HBM copy).
    x2 = x.reshape(B * C, S)

    TB = B if B <= 8 else 8          # multiple of 8 when batch is tiled
    B_pad = _round_up(B, TB)
    TR = TB * C

    # Lane-dense spatial chunk sized to ~8 MiB per (double-buffered) buffer.
    itemsize = x2.dtype.itemsize
    budget_elems = (8 * 1024 * 1024) // max(1, TR * itemsize)
    s_chunk = max(128, (budget_elems // 128) * 128)
    S_128 = _round_up(S, 128)
    if S_128 <= s_chunk:
        s_chunk = S_128
    S_pad = _round_up(S, s_chunk)

    if (B_pad * C, S_pad) != (B * C, S):
        # Zero padding does not change the sum; mean divides by the true S.
        x2 = jnp.pad(x2, ((0, B_pad * C - B * C), (0, S_pad - S)))

    grid = (B_pad // TB, S_pad // s_chunk)
    out = pl.pallas_call(
        functools.partial(_attention_kernel, inv_s=1.0 / S, tb=TB, c=C),
        out_shape=jax.ShapeDtypeStruct((B_pad, K), jnp.float32),
        grid=grid,
        in_specs=[
            pl.BlockSpec((TR, s_chunk), lambda b, s: (b, s)),
            # Small params: constant index_map -> DMA'd once, stay resident.
            pl.BlockSpec((C, K), lambda b, s: (0, 0)),
            pl.BlockSpec((1, K), lambda b, s: (0, 0)),
            pl.BlockSpec((K, K), lambda b, s: (0, 0)),
            pl.BlockSpec((1, K), lambda b, s: (0, 0)),
        ],
        out_specs=pl.BlockSpec((TB, K), lambda b, s: (b, 0)),
        scratch_shapes=[pltpu.VMEM((TR, 1), jnp.float32)],
        compiler_params=pltpu.CompilerParams(
            dimension_semantics=("parallel", "arbitrary"),
            vmem_limit_bytes=48 * 1024 * 1024),
    )(x2,
      w1.astype(jnp.float32),
      b1.reshape(1, K).astype(jnp.float32),
      w2.astype(jnp.float32),
      b2.reshape(1, K).astype(jnp.float32))
    return out[:B]


# ---------------------------------------------------------------------------
# 2) weight aggregation: attn @ weight.view(K, -1)   (bias aggregated in JAX)
# ---------------------------------------------------------------------------
def _aggregate_kernel(attn_ref, w_ref, out_ref):
    out_ref[...] = jnp.dot(attn_ref[...], w_ref[...],
                           preferred_element_type=jnp.float32
                           ).astype(out_ref.dtype)


def aggregate_weights(attn, weight, out_dtype):
    """attn: (B, K) f32; weight: (K, O, Cg, k, k, k) in its native dtype.
    Returns (B, O*Cg*k^3) aggregated weights in `out_dtype` (PyTorch order)."""
    B, K = attn.shape
    N = int(np.prod(weight.shape[1:]))
    # No concat / no upcast copy: stream the weight in its native dtype.
    w2d = weight.reshape(K, N)

    # Big lane-dense column blocks (up to 32K lanes) -> few grid steps.
    N_128 = _round_up(N, 128)
    n_blk = -(-N_128 // (32 * 1024))
    TN = _round_up(-(-N_128 // n_blk), 128)
    N_pad = TN * n_blk
    if N_pad != N:
        w2d = jnp.pad(w2d, ((0, 0), (0, N_pad - N)))

    out = pl.pallas_call(
        _aggregate_kernel,
        out_shape=jax.ShapeDtypeStruct((B, N_pad), out_dtype),
        grid=(N_pad // TN,),
        in_specs=[
            pl.BlockSpec((B, K), lambda n: (0, 0)),
            pl.BlockSpec((K, TN), lambda n: (0, n)),
        ],
        out_specs=pl.BlockSpec((B, TN), lambda n: (0, n)),
        compiler_params=pltpu.CompilerParams(
            dimension_semantics=("parallel",)),
    )(attn, w2d)
    return out[:, :N]


# ---------------------------------------------------------------------------
# 3) dynamic conv3d: fused im2col + per-batch matmul (k^3 tap accumulation)
# ---------------------------------------------------------------------------
def _dynconv_kernel(x_ref, w_ref, b_ref, o_ref, *, k, dilation, td, ho, wo):
    # x_ref: (1, C, Dp, Hp, Wp) padded input, resident for the whole batch.
    # w_ref: (1, k^3, O, C) tap-major aggregated weight (native dtype).
    # b_ref: (1, O, 1) f32 aggregated bias.
    # o_ref: (1, O, TS) output tile, TS = td*ho*wo.
    dt = pl.program_id(1)
    d0 = dt * td
    c = x_ref.shape[1]
    o = o_ref.shape[1]
    ts = td * ho * wo

    acc = jnp.zeros((o, ts), jnp.float32)
    for kd in range(k):
        # Depth window for this tap row, loaded once (stride == 1).
        xd = x_ref[0, :, pl.ds(d0 + kd * dilation, td), :, :]   # (C, td, Hp, Wp)
        for kh in range(k):
            for kw in range(k):
                tap = (kd * k + kh) * k + kw
                xs = xd[:, :,
                        kh * dilation: kh * dilation + ho,
                        kw * dilation: kw * dilation + wo]       # (C, td, ho, wo)
                xs = xs.reshape(c, ts)
                wt = w_ref[0, tap]                               # (O, C)
                # Native-dtype MXU operands, f32 accumulation.
                acc = acc + jnp.dot(wt, xs,
                                    preferred_element_type=jnp.float32)
    o_ref[0] = (acc + b_ref[0]).astype(o_ref.dtype)


def dynamic_conv3d_apply(x, w_agg_flat, b_agg, kernel_size, stride, padding,
                         dilation, groups):
    if groups != 1:
        # TODO(synk): groups > 1 grouped dynamic conv not implemented here.
        raise NotImplementedError("Pallas conv path only supports groups=1")
    if stride != 1:
        # TODO(synk): stride > 1 needs strided lane reads in the fused im2col.
        raise NotImplementedError("Pallas conv path only supports stride=1")

    B, C, D, H, W = x.shape
    k = kernel_size
    O = b_agg.shape[1]
    eff = dilation * (k - 1) + 1
    Do = D + 2 * padding - eff + 1
    Ho = H + 2 * padding - eff + 1
    Wo = W + 2 * padding - eff + 1
    HoWo = Ho * Wo
    S_out = Do * HoWo

    # Tap-major weight layout (B, k^3, O, C): each tap's (O, C) slab is a
    # clean block read in the kernel.  Layout plumbing only (tiny transpose).
    w_tap = (w_agg_flat.reshape(B, O, C, k, k, k)
             .transpose(0, 3, 4, 5, 1, 2)
             .reshape(B, k ** 3, O, C))

    # Output-depth tiling: keep the per-tile working set under ~8 MiB and the
    # flattened output tile lane-dense (multiple of 128 lanes when tiled).
    out_itemsize = x.dtype.itemsize
    bytes_per_d = HoWo * (O * 4 + 2 * O * out_itemsize + C * x.dtype.itemsize)
    td_unit = 128 // math.gcd(HoWo, 128)
    td_budget = (8 * 1024 * 1024 // max(1, bytes_per_d)) // td_unit * td_unit
    td_budget = max(td_unit, td_budget)
    if Do <= td_budget:
        TD, n_dt = Do, 1
    else:
        TD = td_budget
        n_dt = -(-Do // TD)
    Do_pad = n_dt * TD
    TS = TD * HoWo
    S_pad = Do_pad * HoWo

    # Pad x once in HBM (conv halo + depth round-up); the kernel streams it
    # exactly once per batch — no materialized im2col patch tensor.
    x_p = jnp.pad(x, ((0, 0), (0, 0),
                      (padding, padding + (Do_pad - Do)),
                      (padding, padding),
                      (padding, padding)))
    Dp, Hp, Wp = x_p.shape[2], x_p.shape[3], x_p.shape[4]

    out = pl.pallas_call(
        functools.partial(_dynconv_kernel, k=k, dilation=dilation,
                          td=TD, ho=Ho, wo=Wo),
        out_shape=jax.ShapeDtypeStruct((B, O, S_pad), x.dtype),
        grid=(B, n_dt),
        in_specs=[
            # Whole padded per-batch x, resident across all depth tiles.
            pl.BlockSpec((1, C, Dp, Hp, Wp), lambda b, d: (b, 0, 0, 0, 0)),
            pl.BlockSpec((1, k ** 3, O, C), lambda b, d: (b, 0, 0, 0)),
            pl.BlockSpec((1, O, 1), lambda b, d: (b, 0, 0)),
        ],
        out_specs=pl.BlockSpec((1, O, TS), lambda b, d: (b, 0, d)),
        compiler_params=pltpu.CompilerParams(
            dimension_semantics=("parallel", "parallel"),
            vmem_limit_bytes=48 * 1024 * 1024),
    )(x_p, w_tap, b_agg.reshape(B, O, 1).astype(jnp.float32))

    return out[:, :, :S_out].reshape(B, O, Do, Ho, Wo)


def dynamic_conv3d_forward(x, w1, b1, w2, b2, weight, bias, *,
                           stride=1, padding=0, dilation=1, groups=1):
    kernel_size = int(weight.shape[-1])
    attn = attention3d_forward(x, w1, b1, w2, b2)                 # (B, K) f32
    w_agg = aggregate_weights(attn, weight, x.dtype)              # (B, O*Cg*k^3)
    if bias is None:
        b_agg = jnp.zeros((x.shape[0], weight.shape[1]), jnp.float32)
    else:
        b_agg = jnp.dot(attn, bias.astype(jnp.float32),
                        precision=lax.Precision.HIGHEST)          # (B, O) f32
    return dynamic_conv3d_apply(x, w_agg, b_agg, kernel_size, stride, padding,
                                dilation, groups)


# ---------------------------------------------------------------------------
# Pure-JAX reference mirroring the PyTorch forward (for validation only)
# ---------------------------------------------------------------------------
def _reference_forward(x, w1, b1, w2, b2, weight, bias, stride, padding,
                       dilation, groups):
    HP = jax.lax.Precision.HIGHEST
    B, C, D, H, W = x.shape
    K, O = weight.shape[0], weight.shape[1]
    k = weight.shape[-1]

    pooled = jnp.mean(x.astype(jnp.float32), axis=(2, 3, 4))
    h = jnp.maximum(jnp.dot(pooled, w1, precision=HP) + b1, 0.0)
    logits = jnp.dot(h, w2, precision=HP) + b2
    attn = jax.nn.softmax(logits, axis=1)

    agg_w = jnp.dot(attn, weight.reshape(K, -1),
                    precision=HP).reshape(B * O, C // groups, k, k, k)
    agg_b = jnp.dot(attn, bias, precision=HP).reshape(-1)

    x_r = x.reshape(1, B * C, D, H, W)
    out = jax.lax.conv_general_dilated(
        x_r, agg_w,
        window_strides=(stride,) * 3,
        padding=[(padding, padding)] * 3,
        rhs_dilation=(dilation,) * 3,
        dimension_numbers=("NCDHW", "OIDHW", "NCDHW"),
        feature_group_count=groups * B,
        precision=HP)
    out = out + agg_b[None, :, None, None, None]
    out = out.reshape(B, O, out.shape[-3], out.shape[-2], out.shape[-1])
    return attn, out


if __name__ == "__main__":
    # Small shapes consistent with the module: Dynamic_conv3d(4, 8, 3, K=4)
    B, C, D, H, W = 2, 4, 8, 8, 8
    O, K, k = 8, 4, 3
    stride, padding, dilation, groups = 1, 1, 1, 1

    key = jax.random.PRNGKey(0)
    kx, k1, kb1, k2, kb2, kw, kb = jax.random.split(key, 7)
    x = jax.random.normal(kx, (B, C, D, H, W), dtype=jnp.float32)

    # attention3d params: 1x1x1 convs are dense matmuls; stored as (C_in, C_out).
    w1 = jax.random.normal(k1, (C, K), dtype=jnp.float32) * float(1.0 / np.sqrt(C))
    b1 = jax.random.normal(kb1, (K,), dtype=jnp.float32) * 0.1
    w2 = jax.random.normal(k2, (K, K), dtype=jnp.float32) * float(1.0 / np.sqrt(K))
    b2 = jax.random.normal(kb2, (K,), dtype=jnp.float32) * 0.1

    # Dynamic conv params: weight (K, O, C/g, k, k, k), bias (K, O).
    weight = jax.random.normal(kw, (K, O, C // groups, k, k, k),
                               dtype=jnp.float32) * float(1.0 / np.sqrt(C * k ** 3))
    bias = jax.random.normal(kb, (K, O), dtype=jnp.float32) * 0.1

    out = dynamic_conv3d_forward(x, w1, b1, w2, b2, weight, bias,
                                 stride=stride, padding=padding,
                                 dilation=dilation, groups=groups)
    out = jax.block_until_ready(out)
    attn = jax.block_until_ready(attention3d_forward(x, w1, b1, w2, b2))

    attn_ref, out_ref = _reference_forward(x, w1, b1, w2, b2, weight, bias,
                                           stride, padding, dilation, groups)

    assert attn.shape == (B, K)
    assert out.shape == out_ref.shape == (B, O, D, H, W)
    np.testing.assert_allclose(np.asarray(attn), np.asarray(attn_ref),
                               rtol=2e-3, atol=2e-3)
    np.testing.assert_allclose(np.asarray(attn).sum(axis=1), np.ones(B),
                               rtol=2e-3, atol=2e-3)
    np.testing.assert_allclose(np.asarray(out), np.asarray(out_ref),
                               rtol=1e-2, atol=1e-2)

    print("KERNEL_OK")
</pallas_src>

<mosaic_0001>
module attributes {stable_mosaic.version = 11 : i64} {
  func.func @_attention_kernel(%arg0: i32, %arg1: i32, %arg2: memref<8x512xf32, #tpu.memory_space<vmem>>, %arg3: memref<4x4xf32, #tpu.memory_space<vmem>>, %arg4: memref<1x4xf32, #tpu.memory_space<vmem>>, %arg5: memref<4x4xf32, #tpu.memory_space<vmem>>, %arg6: memref<1x4xf32, #tpu.memory_space<vmem>>, %arg7: memref<2x4xf32, #tpu.memory_space<vmem>>, %arg8: memref<8x1xf32, #tpu.memory_space<vmem>>) attributes {dimension_semantics = [#tpu.dimension_semantics<parallel>, #tpu.dimension_semantics<arbitrary>], iteration_bounds = array<i64: 1, 1>, scalar_prefetch = 0 : i64, scratch_operands = 1 : i64, tpu.core_type = #tpu.core_type<tc>, window_params = [{transform_indices = @transform_0, window_bounds = array<i64: 8, 512>}, {pipeline_mode = #tpu.pipeline_mode<synchronous>, transform_indices = @transform_1, window_bounds = array<i64: 4, 4>}, {pipeline_mode = #tpu.pipeline_mode<synchronous>, transform_indices = @transform_2, window_bounds = array<i64: 1, 4>}, {pipeline_mode = #tpu.pipeline_mode<synchronous>, transform_indices = @transform_3, window_bounds = array<i64: 4, 4>}, {pipeline_mode = #tpu.pipeline_mode<synchronous>, transform_indices = @transform_4, window_bounds = array<i64: 1, 4>}, {transform_indices = @transform_5, window_bounds = array<i64: 2, 4>}]} {
    %c0_i32 = arith.constant 0 : i32
    %0 = arith.cmpi eq, %arg1, %c0_i32 : i32
    %1 = arith.extui %0 : i1 to i32
    %c0_i32_0 = arith.constant 0 : i32
    %2 = arith.cmpi ne, %1, %c0_i32_0 : i32
    scf.if %2 {
      %cst_8 = arith.constant 0.000000e+00 : f32
      %12 = vector.broadcast %cst_8 : f32 to vector<8x1xf32>
      %c0_9 = arith.constant 0 : index
      %c0_10 = arith.constant 0 : index
      %13 = vector.load %arg8[%c0_9, %c0_10] : memref<8x1xf32, #tpu.memory_space<vmem>>, vector<8x1xf32>
      tpu.vector_store %arg8[%c0_9, %c0_10], %12 {strides = array<i32>} : memref<8x1xf32, #tpu.memory_space<vmem>>, vector<8x1xf32>,
    } else {
    }
    %c0 = arith.constant 0 : index
    %c0_1 = arith.constant 0 : index
    %3 = vector.load %arg8[%c0, %c0_1] : memref<8x1xf32, #tpu.memory_space<vmem>>, vector<8x1xf32>
    %c0_2 = arith.constant 0 : index
    %c0_3 = arith.constant 0 : index
    %4 = vector.load %arg2[%c0_2, %c0_3] : memref<8x512xf32, #tpu.memory_space<vmem>>, vector<8x512xf32>
    %cst = arith.constant dense<0.000000e+00> : vector<8xf32>
    %5 = vector.multi_reduction <add>, %4, %cst [1] : vector<8x512xf32> to vector<8xf32>
    %6 = vector.shape_cast %5 : vector<8xf32> to vector<8x1xf32>
    %7 = arith.addf %3, %6 : vector<8x1xf32>
    %c0_4 = arith.constant 0 : index
    %c0_5 = arith.constant 0 : index
    %8 = vector.load %arg8[%c0_4, %c0_5] : memref<8x1xf32, #tpu.memory_space<vmem>>, vector<8x1xf32>
    tpu.vector_store %arg8[%c0_4, %c0_5], %7 {strides = array<i32>} : memref<8x1xf32, #tpu.memory_space<vmem>>, vector<8x1xf32>,
    %c0_i32_6 = arith.constant 0 : i32
    %9 = arith.cmpi eq, %arg1, %c0_i32_6 : i32
    %10 = arith.extui %9 : i1 to i32
    %c0_i32_7 = arith.constant 0 : i32
    %11 = arith.cmpi ne, %10, %c0_i32_7 : i32
    scf.if %11 {
      %c0_8 = arith.constant 0 : index
      %c0_9 = arith.constant 0 : index
      %12 = vector.load %arg8[%c0_8, %c0_9] : memref<8x1xf32, #tpu.memory_space<vmem>>, vector<8x1xf32>
      %cst_10 = arith.constant 0.001953125 : f32
      %13 = vector.broadcast %cst_10 : f32 to vector<8x1xf32>
      %14 = arith.mulf %12, %13 : vector<8x1xf32>
      %15 = vector.shape_cast %14 : vector<8x1xf32> to vector<2x4xf32>
      %c0_11 = arith.constant 0 : index
      %c0_12 = arith.constant 0 : index
      %16 = vector.load %arg3[%c0_11, %c0_12] : memref<4x4xf32, #tpu.memory_space<vmem>>, vector<4x4xf32>
      %cst_13 = arith.constant dense<0.000000e+00> : vector<2x4xf32>
      %17 = tpu.matmul %15, %16, %cst_13 {dimension_numbers = #tpu.dot_dimension_numbers<[1], [0], [0], [1], [0, 0, 1, 1], [], []>} : vector<2x4xf32>, vector<4x4xf32>, vector<2x4xf32> -> vector<2x4xf32>
      %c0_14 = arith.constant 0 : index
      %c0_15 = arith.constant 0 : index
      %18 = vector.load %arg4[%c0_14, %c0_15] : memref<1x4xf32, #tpu.memory_space<vmem>>, vector<1x4xf32>
      %19 = vector.broadcast %18 : vector<1x4xf32> to vector<2x4xf32>
      %20 = arith.addf %17, %19 : vector<2x4xf32>
      %cst_16 = arith.constant 0.000000e+00 : f32
      %21 = vector.broadcast %cst_16 : f32 to vector<2x4xf32>
      %22 = arith.maximumf %20, %21 : vector<2x4xf32>
      %c0_17 = arith.constant 0 : index
      %c0_18 = arith.constant 0 : index
      %23 = vector.load %arg5[%c0_17, %c0_18] : memref<4x4xf32, #tpu.memory_space<vmem>>, vector<4x4xf32>
      %cst_19 = arith.constant dense<0.000000e+00> : vector<2x4xf32>
      %24 = tpu.matmul %22, %23, %cst_19 {dimension_numbers = #tpu.dot_dimension_numbers<[1], [0], [0], [1], [0, 0, 1, 1], [], []>} : vector<2x4xf32>, vector<4x4xf32>, vector<2x4xf32> -> vector<2x4xf32>
      %c0_20 = arith.constant 0 : index
      %c0_21 = arith.constant 0 : index
      %25 = vector.load %arg6[%c0_20, %c0_21] : memref<1x4xf32, #tpu.memory_space<vmem>>, vector<1x4xf32>
      %26 = vector.broadcast %25 : vector<1x4xf32> to vector<2x4xf32>
      %27 = arith.addf %24, %26 : vector<2x4xf32>
      %cst_22 = arith.constant dense<0xFF800000> : vector<2xf32>
      %28 = vector.multi_reduction <maximumf>, %27, %cst_22 [1] : vector<2x4xf32> to vector<2xf32>
      %29 = vector.shape_cast %28 : vector<2xf32> to vector<2x1xf32>
      %30 = vector.broadcast %29 : vector<2x1xf32> to vector<2x4xf32>
      %31 = arith.subf %27, %30 : vector<2x4xf32>
      %32 = math.exp %31 : vector<2x4xf32>
      %cst_23 = arith.constant dense<0.000000e+00> : vector<2xf32>
      %33 = vector.multi_reduction <add>, %32, %cst_23 [1] : vector<2x4xf32> to vector<2xf32>
      %34 = vector.shape_cast %33 : vector<2xf32> to vector<2x1xf32>
      %35 = tpu.reciprocal %34 : vector<2x1xf32> -> vector<2x1xf32>
      %36 = vector.broadcast %35 : vector<2x1xf32> to vector<2x4xf32>
      %37 = arith.mulf %32, %36 : vector<2x4xf32>
      %c0_24 = arith.constant 0 : index
      %c0_25 = arith.constant 0 : index
      %38 = vector.load %arg7[%c0_24, %c0_25] : memref<2x4xf32, #tpu.memory_space<vmem>>, vector<2x4xf32>
      tpu.vector_store %arg7[%c0_24, %c0_25], %37 {strides = array<i32>} : memref<2x4xf32, #tpu.memory_space<vmem>>, vector<2x4xf32>,
    } else {
    }
    return
  }
  func.func @transform_0(%arg0: i32, %arg1: i32) -> (i32, i32) {
    %c0_i32 = arith.constant 0 : i32
    return %arg0, %arg1 : i32, i32
  }
  func.func @transform_1(%arg0: i32, %arg1: i32) -> (i32, i32) {
    %c0_i32 = arith.constant 0 : i32
    %c0_i32_0 = arith.constant 0 : i32
    %c0_i32_1 = arith.constant 0 : i32
    return %c0_i32, %c0_i32_0 : i32, i32
  }
  func.func @transform_2(%arg0: i32, %arg1: i32) -> (i32, i32) {
    %c0_i32 = arith.constant 0 : i32
    %c0_i32_0 = arith.constant 0 : i32
    %c0_i32_1 = arith.constant 0 : i32
    return %c0_i32, %c0_i32_0 : i32, i32
  }
  func.func @transform_3(%arg0: i32, %arg1: i32) -> (i32, i32) {
    %c0_i32 = arith.constant 0 : i32
    %c0_i32_0 = arith.constant 0 : i32
    %c0_i32_1 = arith.constant 0 : i32
    return %c0_i32, %c0_i32_0 : i32, i32
  }
  func.func @transform_4(%arg0: i32, %arg1: i32) -> (i32, i32) {
    %c0_i32 = arith.constant 0 : i32
    %c0_i32_0 = arith.constant 0 : i32
    %c0_i32_1 = arith.constant 0 : i32
    return %c0_i32, %c0_i32_0 : i32, i32
  }
  func.func @transform_5(%arg0: i32, %arg1: i32) -> (i32, i32) {
    %c0_i32 = arith.constant 0 : i32
    %c0_i32_0 = arith.constant 0 : i32
    return %arg0, %c0_i32 : i32, i32
  }
}

</mosaic_0001>

<llo_original>
// kernel: tpu_custom_call.1
$region0: #{tpu_custom_call.1}
  #allocation0 [shape = 'u32[]', space=smem, size = 0x4, offset = 0x4, fixed_abs, tag = 'smem constant byte address 0x4 - core index']
  #allocation1 [shape = 'u32[144,128]{1,0:T(1,128)}', space=vmem, size = 0x12000, scoped, tag = 'internal scratch']
  #allocation2 [shape = 'f32[8,1]{1,0:T(8,128)}', space=vmem, size = 0x1000, scoped, tag = 'scratch operand']
  %s0 = inlined_call_operand.hbm [shape: f32[8,512], index: 0, kind: input, shape index: {}]
  %s1 = inlined_call_operand.hbm [shape: f32[4,4], index: 1, kind: input, shape index: {}]
  %s2 = inlined_call_operand.vmem [shape: f32[1,4], index: 2, kind: input, shape index: {}]
  %s3 = inlined_call_operand.vmem [shape: f32[4,4], index: 3, kind: input, shape index: {}]
  %s4 = inlined_call_operand.vmem [shape: f32[1,4], index: 4, kind: input, shape index: {}]
  %s5 = inlined_call_operand.hbm [shape: f32[2,4], index: 5, kind: output, shape index: {}]
  %s6 = sld [smem:[#allocation0]]
  $region46: #{tpu_custom_call.1} parent=0
    _
  %s8 = ssub.s32 1, %s6
  %s9 = scalar_select 0, %s8, %s6
  $region1: #{tpu_custom_call.1} parent=0
    #allocation3 [shape = 'u8[16384]{0}', space=vmem, size = 0x4000, scoped, tag = 'input window, operand 0, single buffered']
    #allocation4 [shape = 's32[1]{0}', space=sflag, size = 0x4, scoped, tag = 'scoped memory for tpu_custom_call.1']
    #allocation5 [shape = 's32[1]{0}', space=sflag, size = 0x4, scoped, tag = 'scoped memory for tpu_custom_call.1']
    #allocation6 [shape = 'u8[2048]{0}', space=vmem, size = 0x800, scoped, tag = 'input window, operand 1, single buffered']
    #allocation7 [shape = 's32[1]{0}', space=sflag, size = 0x4, scoped, tag = 'scoped memory for tpu_custom_call.1']
    #allocation8 [shape = 'u8[1024]{0}', space=vmem, size = 0x400, scoped, tag = 'output window, operand 0, single buffered']
    %10 = vsyncpa [#allocation4], 0
    %11 = vsyncpa [#allocation7], 0
    %12 = vsyncpa [#allocation5], 0
    // Predicated region
    $region2: #{tpu_custom_call.1} parent=1 // pred_check
      _
    $region3: #{tpu_custom_call.1} parent=1 // pred_check_branch
      %14 = sbr.rel (0) target = $region5
    $region4: #{tpu_custom_call.1} parent=1 // pred_region
      %s16 = ssub.s32 512, 512
      %17 = vsyncadd [#allocation4], %s16
      %s19 = sshll.u32 [#allocation3], 4
      %s20 = int_to_ptr.vmem [resolvable:$true] %s19
      %22 = dma.hbm_to_vmem [thread:$0]  %s0, 512, %s20, [#allocation4]
    $region5: #{tpu_custom_call.1} parent=1 // pred_fallthru
      _
    // Predicated region
    $region6: #{tpu_custom_call.1} parent=1 // pred_check
      _
    $region7: #{tpu_custom_call.1} parent=1 // pred_check_branch
      %24 = sbr.rel (0) target = $region9
    $region8: #{tpu_custom_call.1} parent=1 // pred_region
      %s26 = ssub.s32 64, 64
      %27 = vsyncadd [#allocation7], %s26
      %s29 = sshll.u32 [#allocation6], 4
      %s30 = int_to_ptr.vmem [resolvable:$true] %s29
      %32 = dma.hbm_to_vmem [thread:$0]  %s1, 64, %s30, [#allocation7]
    $region9: #{tpu_custom_call.1} parent=1 // pred_fallthru
      _
    // Predicated region
    $region10: #{tpu_custom_call.1} parent=1 // pred_check
      _
    $region11: #{tpu_custom_call.1} parent=1 // pred_check_branch
      %34 = sbr.rel (0) target = $region13
    $region12: #{tpu_custom_call.1} parent=1 // pred_region
      _
    $region13: #{tpu_custom_call.1} parent=1 // pred_fallthru
      _
    // Predicated region
    $region14: #{tpu_custom_call.1} parent=1 // pred_check
      _
    $region15: #{tpu_custom_call.1} parent=1 // pred_check_branch
      %36 = sbr.rel (0) target = $region17
    $region16: #{tpu_custom_call.1} parent=1 // pred_region
      _
    $region17: #{tpu_custom_call.1} parent=1 // pred_fallthru
      _
    // Predicated region
    $region18: #{tpu_custom_call.1} parent=1 // pred_check
      _
    $region19: #{tpu_custom_call.1} parent=1 // pred_check_branch
      %38 = sbr.rel (0) target = $region21
    $region20: #{tpu_custom_call.1} parent=1 // pred_region
      _
    $region21: #{tpu_custom_call.1} parent=1 // pred_fallthru
      _
    // Predicated region
    $region22: #{tpu_custom_call.1} parent=1 // pred_check
      _
    $region23: #{tpu_custom_call.1} parent=1 // pred_check_branch
      %40 = sbr.rel (0) target = $region25
    $region24: #{tpu_custom_call.1} parent=1 // pred_region
      %41 = dma.done [#allocation4], 512
    $region25: #{tpu_custom_call.1} parent=1 // pred_fallthru
      _
    // Predicated region
    $region26: #{tpu_custom_call.1} parent=1 // pred_check
      _
    $region27: #{tpu_custom_call.1} parent=1 // pred_check_branch
      %43 = sbr.rel (0) target = $region29
    $region28: #{tpu_custom_call.1} parent=1 // pred_region
      %44 = dma.done [#allocation7], 64
    $region29: #{tpu_custom_call.1} parent=1 // pred_fallthru
      _
    %p45 = scmp.eq.s32.totalorder 0, 0
    // Predicated region
    $region30: #{tpu_custom_call.1} parent=1 // pred_check
      %p46 = pneg %p45
    $region31: #{tpu_custom_call.1} parent=1 // pred_check_branch
      %48 = sbr.rel (%p46) target = $region33
    $region32: #{tpu_custom_call.1} parent=1 // pred_region
      %vm49 = vcmask 7168
      %50 = vst.msk [vmem:[#allocation2] sm:$0xff] %vm49, 0.0
    $region33: #{tpu_custom_call.1} parent=1 // pred_fallthru
      _
    %v51 = vld [vmem:[#allocation2] sm:$0xff]
    %v52 = vld [vmem:[#allocation3] sm:$0xff]
    %v53 = vld [vmem:[#allocation3 + $0x8] sm:$0xff]
    %v54 = vld [vmem:[#allocation3 + $0x10] sm:$0xff]
    %v55 = vld [vmem:[#allocation3 + $0x18] sm:$0xff]
    %v56 = vadd.f32 %v52, %v53
    %v57 = vadd.f32 %v56, %v54
    %v58 = vadd.f32 %v57, %v55
    %59 = vadd.xlane.f32.xlu0 %v58
    %v60 = vpop.xlane.xlu0 %59
    %v61 = vadd.f32 %v51, %v60
    %vm62 = vcmask 7168
    %63 = vst.msk [vmem:[#allocation2] sm:$0xff] %vm62, %v61
    // Predicated region
    $region34: #{tpu_custom_call.1} parent=1 // pred_check
      %p64 = pneg %p45
    $region35: #{tpu_custom_call.1} parent=1 // pred_check_branch
      %66 = sbr.rel (%p64) target = $region37
    $region36: #{tpu_custom_call.1} parent=1 // pred_region
      %v67 = vld [vmem:[#allocation2] sm:$0xff]
      %v68 = vmul.f32 %v67, 0.001953125
      %v70 = vcombine.high %v68, %v68
      %v71 = vld [vmem:[#allocation6] sm:$0xf]
      %v72 = vld [vmem:[%s2] sm:$0x1]
      %v74 = vlaneseq
      %v75 = vshrl.u32 %v74, 7
      %v76 = vsub.s32 0, %v75
      %v77 = vrot.slane %v72, %v76
      %79 = vset.pattern.permute.xlu0 0
      %80 = vperm.xlu0 %79, %v68
      %v81 = vpop.permute.xlu0 %80
      %82 = vset.pattern.permute.xlu0 0
      %83 = vperm.xlu0 %82, %v70
      %v84 = vpop.permute.xlu0 %83
      %v85 = vlaneseq
      %v86 = vand.u32 %v85, 127
      %v87 = vlaneseq
      %v88 = vshrl.u32 %v87, 7
      %v89 = vsub.s32 %v86, %v88
      %v90 = vrot.slane %v81, %v89
      %v91 = vlaneseq
      %v92 = vshrl.u32 %v91, 7
      %v93 = vsub.s32 %v86, %v92
      %v94 = vrot.slane %v84, %v93
      %vm95 = vcmask 1041409
      %v96 = vsel %vm95, %v94, %v90
      %vm97 = vcmask 31744
      %v98 = vsel %vm97, %v96, 0
      %vm100 = vcmask 1043456
      %v102 = vsel %vm100, %v71, 0
      %104 = vmatprep.subr.mxu0 0.0
      %105 = vmatpush1.msra.mxu0 %v102
      %106 = vmatprep.subr.mxu0 0.0
      %107 = vmatpush1.msra.mxu0 0.0
      %108 = vmatprep.subr.mxu0 0.0
      %109 = vmatpush1.msra.mxu0 0.0
      %110 = vmatprep.subr.mxu0 0.0
      %111 = vmatpush1.msra.mxu0 0.0
      %112 = vmatprep.subr.mxu0 0.0
      %113 = vmatpush1.msra.mxu0 0.0
      %114 = vmatprep.subr.mxu0 0.0
      %115 = vmatpush1.msra.mxu0 0.0
      %116 = vmatprep.subr.mxu0 0.0
      %117 = vmatpush1.msra.mxu0 0.0
      %118 = vmatprep.subr.mxu0 0.0
      %119 = vmatpush1.msra.mxu0 0.0
      %120 = vmatprep.subr.mxu0 0.0
      %121 = vmatpush1.msra.mxu0 0.0
      %122 = vmatprep.subr.mxu0 0.0
      %123 = vmatpush1.msra.mxu0 0.0
      %124 = vmatprep.subr.mxu0 0.0
      %125 = vmatpush1.msra.mxu0 0.0
      %126 = vmatprep.subr.mxu0 0.0
      %127 = vmatpush1.msra.mxu0 0.0
      %128 = vmatprep.subr.mxu0 0.0
      %129 = vmatpush1.msra.mxu0 0.0
      %130 = vmatprep.subr.mxu0 0.0
      %131 = vmatpush1.msra.mxu0 0.0
      %132 = vmatprep.subr.mxu0 0.0
      %133 = vmatpush1.msra.mxu0 0.0
      %134 = vmatprep.subr.mxu0 0.0
      %135 = vmatpush1.msra.mxu0 0.0
      %136 = vmatprep.subr.mxu0 0.0
      %137 = vmatpush1.msra.mxu0 0.0
      %138 = vmatprep.subr.mxu0 0.0
      %139 = vmatpush1.msra.mxu0 0.0
      %140 = vmatprep.subr.mxu0 0.0
      %141 = vmatpush1.msra.mxu0 0.0
      %142 = vmatprep.subr.mxu0 0.0
      %143 = vmatpush1.msra.mxu0 0.0
      %144 = vmatprep.subr.mxu0 0.0
      %145 = vmatpush1.msra.mxu0 0.0
      %146 = vmatprep.subr.mxu0 0.0
      %147 = vmatpush1.msra.mxu0 0.0
      %148 = vmatprep.subr.mxu0 0.0
      %149 = vmatpush1.msra.mxu0 0.0
      %150 = vmatprep.subr.mxu0 0.0
      %151 = vmatpush1.msra.mxu0 0.0
      %152 = vmatprep.subr.mxu0 0.0
      %153 = vmatpush1.msra.mxu0 0.0
      %154 = vmatprep.subr.mxu0 0.0
      %155 = vmatpush1.msra.mxu0 0.0
      %156 = vmatprep.subr.mxu0 0.0
      %157 = vmatpush1.msra.mxu0 0.0
      %158 = vmatprep.subr.mxu0 0.0
      %159 = vmatpush1.msra.mxu0 0.0
      %160 = vmatprep.subr.mxu0 0.0
      %161 = vmatpush1.msra.mxu0 0.0
      %162 = vmatprep.subr.mxu0 0.0
      %163 = vmatpush1.msra.mxu0 0.0
      %164 = vmatprep.subr.mxu0 0.0
      %165 = vmatpush1.msra.mxu0 0.0
      %166 = vmatprep.subr.mxu0 0.0
      %167 = vmatpush1.msra.mxu0 0.0
      %168 = vmatprep.mubr.f32.mxu0 0.0
      %169 = vmatmul.mubr.f32.gmra.mrb[0].mxu0 %v98
      %v170 = vpop.f32.mrb[0].mxu0
      %v171 = vadd.f32 %v77, %v170
      %v172 = vpop.f32.mrb[0].mxu0
      %173 = vdwg.mxu0
      %v174 = vmax.f32 %v171, 0.0
      %v175 = vld [vmem:[%s3] sm:$0xf]
      %v176 = vld [vmem:[%s4] sm:$0x1]
      %v178 = vlaneseq
      %v179 = vshrl.u32 %v178, 7
      %v180 = vsub.s32 0, %v179
      %v181 = vrot.slane %v176, %v180
      %v184 = vsel %vm97, %v174, 0
      %v187 = vsel %vm100, %v175, 0
      %189 = vmatprep.subr.mxu0 0.0
      %190 = vmatpush1.msra.mxu0 %v187
      %191 = vmatprep.subr.mxu0 0.0
      %192 = vmatpush1.msra.mxu0 0.0
      %193 = vmatprep.subr.mxu0 0.0
      %194 = vmatpush1.msra.mxu0 0.0
      %195 = vmatprep.subr.mxu0 0.0
      %196 = vmatpush1.msra.mxu0 0.0
      %197 = vmatprep.subr.mxu0 0.0
      %198 = vmatpush1.msra.mxu0 0.0
      %199 = vmatprep.subr.mxu0 0.0
      %200 = vmatpush1.msra.mxu0 0.0
      %201 = vmatprep.subr.mxu0 0.0
      %202 = vmatpush1.msra.mxu0 0.0
      %203 = vmatprep.subr.mxu0 0.0
      %204 = vmatpush1.msra.mxu0 0.0
      %205 = vmatprep.subr.mxu0 0.0
      %206 = vmatpush1.msra.mxu0 0.0
      %207 = vmatprep.subr.mxu0 0.0
      %208 = vmatpush1.msra.mxu0 0.0
      %209 = vmatprep.subr.mxu0 0.0
      %210 = vmatpush1.msra.mxu0 0.0
      %211 = vmatprep.subr.mxu0 0.0
      %212 = vmatpush1.msra.mxu0 0.0
      %213 = vmatprep.subr.mxu0 0.0
      %214 = vmatpush1.msra.mxu0 0.0
      %215 = vmatprep.subr.mxu0 0.0
      %216 = vmatpush1.msra.mxu0 0.0
      %217 = vmatprep.subr.mxu0 0.0
      %218 = vmatpush1.msra.mxu0 0.0
      %219 = vmatprep.subr.mxu0 0.0
      %220 = vmatpush1.msra.mxu0 0.0
      %221 = vmatprep.subr.mxu0 0.0
      %222 = vmatpush1.msra.mxu0 0.0
      %223 = vmatprep.subr.mxu0 0.0
      %224 = vmatpush1.msra.mxu0 0.0
      %225 = vmatprep.subr.mxu0 0.0
      %226 = vmatpush1.msra.mxu0 0.0
      %227 = vmatprep.subr.mxu0 0.0
      %228 = vmatpush1.msra.mxu0 0.0
      %229 = vmatprep.subr.mxu0 0.0
      %230 = vmatpush1.msra.mxu0 0.0
      %231 = vmatprep.subr.mxu0 0.0
      %232 = vmatpush1.msra.mxu0 0.0
      %233 = vmatprep.subr.mxu0 0.0
      %234 = vmatpush1.msra.mxu0 0.0
      %235 = vmatprep.subr.mxu0 0.0
      %236 = vmatpush1.msra.mxu0 0.0
      %237 = vmatprep.subr.mxu0 0.0
      %238 = vmatpush1.msra.mxu0 0.0
      %239 = vmatprep.subr.mxu0 0.0
      %240 = vmatpush1.msra.mxu0 0.0
      %241 = vmatprep.subr.mxu0 0.0
      %242 = vmatpush1.msra.mxu0 0.0
      %243 = vmatprep.subr.mxu0 0.0
      %244 = vmatpush1.msra.mxu0 0.0
      %245 = vmatprep.subr.mxu0 0.0
      %246 = vmatpush1.msra.mxu0 0.0
      %247 = vmatprep.subr.mxu0 0.0
      %248 = vmatpush1.msra.mxu0 0.0
      %249 = vmatprep.subr.mxu0 0.0
      %250 = vmatpush1.msra.mxu0 0.0
      %251 = vmatprep.subr.mxu0 0.0
      %252 = vmatpush1.msra.mxu0 0.0
      %253 = vmatprep.mubr.f32.mxu0 0.0
      %254 = vmatmul.mubr.f32.gmra.mrb[0].mxu0 %v184
      %v255 = vpop.f32.mrb[0].mxu0
      %v256 = vadd.f32 %v181, %v255
      %v257 = vpop.f32.mrb[0].mxu0
      %258 = vdwg.mxu0
      %vm259 = vcmask 25600
      %v260 = vsel %vm259, %v256, -inf
      %261 = vmax.xlane.f32.xlu0 %v260
      %v262 = vpop.xlane.xlu0 %261
      %v263 = vsub.f32 %v256, %v262
      %v264 = vmul.f32 %v263, 1.442695
      %v265 = vpow.pop %v264
      %v266 = vsel %vm259, %v265, 0.0
      %267 = vadd.xlane.f32.xlu0 %v266
      %v268 = vpop.xlane.xlu0 %267
      %v269 = vrcp.pop %v268
      %v270 = vmul.f32 %v265, %v269
      %271 = vst.msk [vmem:[#allocation8] sm:$0x3] %vm259, %v270
    $region37: #{tpu_custom_call.1} parent=1 // pred_fallthru
      _
    // Predicated region
    $region38: #{tpu_custom_call.1} parent=1 // pred_check
      _
    $region39: #{tpu_custom_call.1} parent=1 // pred_check_branch
      %273 = sbr.rel (0) target = $region41
    $region40: #{tpu_custom_call.1} parent=1 // pred_region
      %s275 = ssub.s32 32, 32
      %276 = vsyncadd [#allocation5], %s275
      %s278 = sshll.u32 [#allocation8], 4
      %s279 = int_to_ptr.vmem [resolvable:$true] %s278
      %281 = dma.vmem_to_hbm [thread:$0]  %s279, 32, %s5, [#allocation5]
    $region41: #{tpu_custom_call.1} parent=1 // pred_fallthru
      _
    // Predicated region
    $region42: #{tpu_custom_call.1} parent=1 // pred_check
      _
    $region43: #{tpu_custom_call.1} parent=1 // pred_check_branch
      %283 = sbr.rel (0) target = $region45
    $region44: #{tpu_custom_call.1} parent=1 // pred_region
      %284 = dma.done [#allocation5], 32
    $region45: #{tpu_custom_call.1} parent=1 // pred_fallthru
      _
    %285 = vsyncpa [#allocation4], 1
    %286 = vsyncpa [#allocation7], 1
    %287 = vsyncpa [#allocation5], 1

</llo_original>
